<compile_context>
chip_gen: v7x
topology: tpu7x:2x2x1
jax: 0.10.0
libtpu: 0.0.40
codegen_flags: <defaults>
</compile_context>

<pallas_src>
import jax
import jax.numpy as jnp
from jax import lax
from jax.experimental import pallas as pl
from jax.experimental.pallas import tpu as pltpu


def _round_up(n, m):
    return ((n + m - 1) // m) * m


def mlp_kernel(x_ref, w1_ref, b1_ref, w2_ref, b2_ref, o_ref):
    # Layer 1: (tile_b, C0) @ (C0, C1) on the MXU.  Cast x to bf16 on the VPU
    # (hidden under the x-tile DMA); accumulate in f32.
    h = jnp.dot(x_ref[...].astype(jnp.bfloat16), w1_ref[...],
                preferred_element_type=jnp.float32)
    h = jnp.maximum(h + b1_ref[...], 0.0)                    # bias + ReLU (f32, VPU)
    # Layer 2, batch-on-lanes: (C2, C1) x (tile_b, C1) contracting C1
    #   -> (C2, tile_b).  Lane-dense store with no C2 padding; the implied
    #   h transpose is an XLU op on an otherwise idle slot.
    y = lax.dot_general(w2_ref[...], h.astype(w2_ref.dtype),
                        dimension_numbers=(((1,), (1,)), ((), ())),
                        preferred_element_type=jnp.float32)
    o_ref[...] = (y + b2_ref[...]).astype(o_ref.dtype)


def prepare_mlp_params(w1, b1, w2, b2):
    """One-time weight layout/dtype prep (hoist out of the per-call path).

    w1: (C1, C0); b1: (C1,); w2: (C2, C1); b2: (C2,)  -- torch Linear layout.
    """
    w1_t = jnp.asarray(w1).T.astype(jnp.bfloat16)        # (C0, C1), MXU-ready
    b1_r = jnp.asarray(b1, jnp.float32).reshape(1, -1)   # (1, C1)
    w2_m = jnp.asarray(w2).astype(jnp.bfloat16)          # (C2, C1), kept torch layout
    b2_c = jnp.asarray(b2, jnp.float32).reshape(-1, 1)   # (C2, 1)
    return w1_t, b1_r, w2_m, b2_c


def mlp_forward_prepared(x, w1_t, b1_r, w2_m, b2_c, *, tile_b=512):
    """y = relu(x @ W1.T + b1) @ W2.T + b2 using pre-prepared params.

    x: (B, C0) any float dtype.  Returns (B, C2) in x.dtype.
    """
    B, C0 = x.shape
    C1 = w1_t.shape[1]
    C2 = w2_m.shape[0]

    # --- batch tiling: multiples of 128, no input padding -------------------
    tile_b = _round_up(max(int(tile_b), 128), 128)
    b_pad = _round_up(B, 128)
    tile_b = min(tile_b, b_pad)
    # Keep >=4 grid steps when the batch allows (>=2 per TensorCore on 2-TC
    # chips) so BlockSpec pipelining hides the x-tile / output DMAs.
    tile_b = min(tile_b, max(128, (b_pad // 4) // 128 * 128))
    num_tiles = pl.cdiv(B, tile_b)

    # --- VMEM budget (incl. the f32 h intermediate + slack) -----------------
    x_bytes = jnp.dtype(x.dtype).itemsize
    vmem_bytes = (2 * tile_b * C0 * x_bytes        # x tile, double-buffered
                  + 2 * C2 * tile_b * x_bytes      # out tile, double-buffered
                  + C0 * C1 * 2 + C2 * C1 * 2      # weights, bf16, single-buffered
                  + (C1 + C2) * 4                  # biases, f32
                  + tile_b * C1 * 4                # h intermediate, f32
                  + tile_b * C0 * 2                # bf16 copy of the x tile
                  + 2 * 1024 * 1024)               # Mosaic internal scratch slack
    compiler_kwargs = dict(dimension_semantics=("parallel",))
    if vmem_bytes > 12 * 1024 * 1024:
        try:
            vmem_cap = int(pltpu.get_tpu_info().vmem_capacity_bytes)
        except Exception:  # pragma: no cover - conservative fallback (v7x per-TC)
            vmem_cap = 64 * 1024 * 1024
        compiler_kwargs["vmem_limit_bytes"] = min(2 * vmem_bytes,
                                                  int(0.7 * vmem_cap))

    # Constant-index operands: fetched once, single-buffered.
    resident = dict(pipeline_mode=pl.Buffered(1))

    out = pl.pallas_call(
        mlp_kernel,
        out_shape=jax.ShapeDtypeStruct((C2, B), x.dtype),
        grid_spec=pltpu.PrefetchScalarGridSpec(
            num_scalar_prefetch=0,
            grid=(num_tiles,),
            in_specs=[
                pl.BlockSpec((tile_b, C0), lambda i: (i, 0)),            # x tile
                pl.BlockSpec((C0, C1), lambda i: (0, 0), **resident),    # W1^T
                pl.BlockSpec((1, C1), lambda i: (0, 0), **resident),     # b1
                pl.BlockSpec((C2, C1), lambda i: (0, 0), **resident),    # W2
                pl.BlockSpec((C2, 1), lambda i: (0, 0), **resident),     # b2
            ],
            out_specs=pl.BlockSpec((C2, tile_b), lambda i: (0, i)),      # batch on lanes
        ),
        compiler_params=pltpu.CompilerParams(**compiler_kwargs),
    )(x, w1_t, b1_r, w2_m, b2_c)

    # (C2, B) -> (B, C2): tiny (C2 is 1 for ECON-MLP), cheap transpose.
    return out.T


def mlp_forward(x, w1, b1, w2, b2, *, tile_b=512):
    """Convenience wrapper taking raw torch-layout weights (prep done per call;
    prefer prepare_mlp_params + mlp_forward_prepared in a real serving loop)."""
    return mlp_forward_prepared(x, *prepare_mlp_params(w1, b1, w2, b2),
                                tile_b=tile_b)


def _torch_linear_init(key, out_f, in_f, dtype=jnp.float32):
    # PyTorch-style uniform(-1/sqrt(fan_in), 1/sqrt(fan_in)).
    kw, kb = jax.random.split(key)
    bound = 1.0 / float(in_f) ** 0.5
    w = jax.random.uniform(kw, (out_f, in_f), dtype, minval=-bound, maxval=bound)
    b = jax.random.uniform(kb, (out_f,), dtype, minval=-bound, maxval=bound)
    return w, b


if __name__ == "__main__":
    # Small shapes consistent with MLP(channels=[C0, C1, C2]); B is deliberately
    # NOT a multiple of 128 to exercise the ragged last-block path.
    B, C0, C1, C2 = 400, 256, 128, 1
    key = jax.random.PRNGKey(0)
    kx, k1, k2 = jax.random.split(key, 3)

    x = jax.random.normal(kx, (B, C0), jnp.float32)
    w1, b1 = _torch_linear_init(k1, C1, C0)
    w2, b2 = _torch_linear_init(k2, C2, C1)

    params = prepare_mlp_params(w1, b1, w2, b2)    # one-time prep, hoisted
    out = mlp_forward_prepared(x, *params)
    out = jax.block_until_ready(out)

    # Pure-JAX f32 reference; tolerance loosened because the kernel feeds the
    # MXU bf16 inputs (with f32 accumulation) — expected, not a bug.
    ref = jnp.maximum(x @ w1.T + b1, 0.0) @ w2.T + b2
    assert out.shape == (B, C2)
    assert jnp.allclose(out, ref, atol=5e-2, rtol=5e-2), "mismatch vs reference"

    print("KERNEL_OK")
</pallas_src>

<mosaic_0001>
module attributes {stable_mosaic.version = 11 : i64} {
  func.func @mlp_kernel(%arg0: i32, %arg1: memref<128x256xf32, #tpu.memory_space<vmem>>, %arg2: memref<256x128xbf16, #tpu.memory_space<vmem>>, %arg3: memref<1x128xf32, #tpu.memory_space<vmem>>, %arg4: memref<1x128xbf16, #tpu.memory_space<vmem>>, %arg5: memref<1x1xf32, #tpu.memory_space<vmem>>, %arg6: memref<1x128xf32, #tpu.memory_space<vmem>>) attributes {dimension_semantics = [#tpu.dimension_semantics<parallel>], iteration_bounds = array<i64: 4>, scalar_prefetch = 0 : i64, scratch_operands = 0 : i64, tpu.core_type = #tpu.core_type<tc>, window_params = [{transform_indices = @transform_0, window_bounds = array<i64: 128, 256>}, {pipeline_mode = #tpu.pipeline_mode<synchronous>, transform_indices = @transform_1, window_bounds = array<i64: 256, 128>}, {pipeline_mode = #tpu.pipeline_mode<synchronous>, transform_indices = @transform_2, window_bounds = array<i64: 1, 128>}, {pipeline_mode = #tpu.pipeline_mode<synchronous>, transform_indices = @transform_3, window_bounds = array<i64: 1, 128>}, {pipeline_mode = #tpu.pipeline_mode<synchronous>, transform_indices = @transform_4, window_bounds = array<i64: 1, 1>}, {transform_indices = @transform_5, window_bounds = array<i64: 1, 128>}]} {
    %c0 = arith.constant 0 : index
    %c0_0 = arith.constant 0 : index
    %0 = vector.load %arg1[%c0, %c0_0] : memref<128x256xf32, #tpu.memory_space<vmem>>, vector<128x256xf32>
    %1 = arith.truncf %0 : vector<128x256xf32> to vector<128x256xbf16>
    %c0_1 = arith.constant 0 : index
    %c0_2 = arith.constant 0 : index
    %2 = vector.load %arg2[%c0_1, %c0_2] : memref<256x128xbf16, #tpu.memory_space<vmem>>, vector<256x128xbf16>
    %cst = arith.constant dense<0.000000e+00> : vector<128x128xf32>
    %3 = tpu.matmul %1, %2, %cst {dimension_numbers = #tpu.dot_dimension_numbers<[1], [0], [0], [1], [0, 0, 1, 1], [], []>} : vector<128x256xbf16>, vector<256x128xbf16>, vector<128x128xf32> -> vector<128x128xf32>
    %c0_3 = arith.constant 0 : index
    %c0_4 = arith.constant 0 : index
    %4 = vector.load %arg3[%c0_3, %c0_4] : memref<1x128xf32, #tpu.memory_space<vmem>>, vector<1x128xf32>
    %5 = vector.broadcast %4 : vector<1x128xf32> to vector<128x128xf32>
    %6 = arith.addf %3, %5 : vector<128x128xf32>
    %cst_5 = arith.constant 0.000000e+00 : f32
    %7 = vector.broadcast %cst_5 : f32 to vector<128x128xf32>
    %8 = arith.maximumf %6, %7 : vector<128x128xf32>
    %c0_6 = arith.constant 0 : index
    %c0_7 = arith.constant 0 : index
    %9 = vector.load %arg4[%c0_6, %c0_7] : memref<1x128xbf16, #tpu.memory_space<vmem>>, vector<1x128xbf16>
    %10 = arith.truncf %8 : vector<128x128xf32> to vector<128x128xbf16>
    %cst_8 = arith.constant dense<0.000000e+00> : vector<1x128xf32>
    %11 = tpu.matmul %9, %10, %cst_8 {dimension_numbers = #tpu.dot_dimension_numbers<[1], [1], [0], [0], [0, 0, 1, 0], [], []>} : vector<1x128xbf16>, vector<128x128xbf16>, vector<1x128xf32> -> vector<1x128xf32>
    %c0_9 = arith.constant 0 : index
    %c0_10 = arith.constant 0 : index
    %12 = vector.load %arg5[%c0_9, %c0_10] : memref<1x1xf32, #tpu.memory_space<vmem>>, vector<1x1xf32>
    %13 = vector.broadcast %12 : vector<1x1xf32> to vector<1x128xf32>
    %14 = arith.addf %11, %13 : vector<1x128xf32>
    %c0_11 = arith.constant 0 : index
    %c0_12 = arith.constant 0 : index
    %15 = vector.load %arg6[%c0_11, %c0_12] : memref<1x128xf32, #tpu.memory_space<vmem>>, vector<1x128xf32>
    tpu.vector_store %arg6[%c0_11, %c0_12], %14 {strides = array<i32>} : memref<1x128xf32, #tpu.memory_space<vmem>>, vector<1x128xf32>,
    return
  }
  func.func @transform_0(%arg0: i32) -> (i32, i32) {
    %c0_i32 = arith.constant 0 : i32
    %c0_i32_0 = arith.constant 0 : i32
    return %arg0, %c0_i32 : i32, i32
  }
  func.func @transform_1(%arg0: i32) -> (i32, i32) {
    %c0_i32 = arith.constant 0 : i32
    %c0_i32_0 = arith.constant 0 : i32
    %c0_i32_1 = arith.constant 0 : i32
    return %c0_i32, %c0_i32_0 : i32, i32
  }
  func.func @transform_2(%arg0: i32) -> (i32, i32) {
    %c0_i32 = arith.constant 0 : i32
    %c0_i32_0 = arith.constant 0 : i32
    %c0_i32_1 = arith.constant 0 : i32
    return %c0_i32, %c0_i32_0 : i32, i32
  }
  func.func @transform_3(%arg0: i32) -> (i32, i32) {
    %c0_i32 = arith.constant 0 : i32
    %c0_i32_0 = arith.constant 0 : i32
    %c0_i32_1 = arith.constant 0 : i32
    return %c0_i32, %c0_i32_0 : i32, i32
  }
  func.func @transform_4(%arg0: i32) -> (i32, i32) {
    %c0_i32 = arith.constant 0 : i32
    %c0_i32_0 = arith.constant 0 : i32
    %c0_i32_1 = arith.constant 0 : i32
    return %c0_i32, %c0_i32_0 : i32, i32
  }
  func.func @transform_5(%arg0: i32) -> (i32, i32) {
    %c0_i32 = arith.constant 0 : i32
    %c0_i32_0 = arith.constant 0 : i32
    return %c0_i32, %arg0 : i32, i32
  }
}

</mosaic_0001>

<llo_original>
// kernel: tpu_custom_call.1
$region0: #{tpu_custom_call.1}
  #allocation0 [shape = 'u32[]', space=smem, size = 0x4, offset = 0x4, fixed_abs, tag = 'smem constant byte address 0x4 - core index']
  #allocation1 [shape = 'u32[144,128]{1,0:T(1,128)}', space=vmem, size = 0x12000, scoped, tag = 'internal scratch']
  #allocation2 [shape = 'f32[1,1]{1,0:T(1,128)S(1)}', space=vmem, size = 0x200, scoped, tag = 'scoped memory for tpu_custom_call.1']
  %s0 = inlined_call_operand.hbm [shape: f32[400,256], index: 0, kind: input, shape index: {}]
  %s1 = inlined_call_operand.hbm [shape: bf16[256,128], index: 1, kind: input, shape index: {}]
  %s2 = inlined_call_operand.vmem [shape: f32[1,128], index: 2, kind: input, shape index: {}]
  %s3 = inlined_call_operand.vmem [shape: bf16[1,128], index: 3, kind: input, shape index: {}]
  %s4 = inlined_call_operand.<no memory space> [shape: f32[1,1], index: 4, kind: input, shape index: {}]
  %s5 = inlined_call_operand.hbm [shape: f32[1,400], index: 5, kind: output, shape index: {}]
  %s6 = sld [smem:[#allocation0]]
  $region61: #{tpu_custom_call.1} parent=0
    _
  %s8 = ssub.s32 1, %s6
  %s9 = scalar_select 0, %s8, %s6
  %v10 = vstv %s4
  %11 = vst [vmem:[#allocation2] sm:$0x1] %v10
  $region1: #{tpu_custom_call.1} parent=0
    #allocation3 [shape = 'u8[262144]{0}', space=vmem, size = 0x40000, scoped, tag = 'input window, operand 0']
    #allocation4 [shape = 's32[2]{0}', space=sflag, size = 0x8, scoped, tag = 'scoped memory for tpu_custom_call.1']
    #allocation5 [shape = 's32[2]{0}', space=sflag, size = 0x8, scoped, tag = 'scoped memory for tpu_custom_call.1']
    #allocation6 [shape = 'u8[65536]{0}', space=vmem, size = 0x10000, scoped, tag = 'input window, operand 1, single buffered']
    #allocation7 [shape = 's32[1]{0}', space=sflag, size = 0x4, scoped, tag = 'scoped memory for tpu_custom_call.1']
    #allocation8 [shape = 'u8[1024]{0}', space=vmem, size = 0x400, scoped, tag = 'output window, operand 0']
    %12 = vsyncpa [#allocation4], 0
    %s13 = scalar_lea.sflag [#allocation4], 1
    %14 = vsyncpa %s13, 0
    %15 = vsyncpa [#allocation7], 0
    %16 = vsyncpa [#allocation5], 0
    %s17 = scalar_lea.sflag [#allocation5], 1
    %18 = vsyncpa %s17, 0
    loop: start=0, step=1, limit=6
    $region2: #{tpu_custom_call.1} parent=1 // loop_pre_header
      _
    $region3: #{tpu_custom_call.1} parent=1 // loop_header
      %s20 = sphi 0, %s24
      %p21 = scmp.ge.s32.totalorder %s20, 6
      %s30 = sphi 0, %s32
      %s33 = sphi 0, %s30
      %s34 = sphi 0, %s33
      %s50 = sphi 0, %s34
      %s54 = sphi 0, %s54
      %s56 = sphi 0, %s54
      %s57 = sphi 0, %s56
      %s71 = sphi 0, %s57
      %s75 = sphi 0, %s75
      %s77 = sphi 0, %s75
      %s78 = sphi 0, %s77
      %s92 = sphi 0, %s78
      %s96 = sphi 0, %s96
      %s98 = sphi 0, %s96
      %s99 = sphi 0, %s98
      %s113 = sphi 0, %s99
      %s117 = sphi 0, %s117
      %s119 = sphi 0, %s117
      %s120 = sphi 0, %s119
      %s134 = sphi 0, %s120
      %s140 = sphi 0, %s142
      %s143 = sphi 0, %s140
      %s144 = sphi 0, %s143
      %s160 = sphi 0, %s144
    $region4: #{tpu_custom_call.1} parent=1 // loop_header_branch
      %23 = sbr.rel (%p21) target = $region8
    $region5: #{tpu_custom_call.1} parent=1 // loop_body
      %s25 = ssub.s32 %s20, 1
      %s26 = ssub.s32 %s20, 2
      %s27 = sadd.s32 %s20, 1
      %s28 = ssub.s32 %s20, %s27
      %p29 = scmp.eq.s32.totalorder %s28, 0
      %s31 = sadd.s32 %s30, 1
      %s32 = scalar_select %p29, %s30, %s31
      %p35 = pneg %p29
      %p36 = scmp.eq.s32.totalorder %s20, 3
      %p37 = por %p35, %p36
      %p38 = scmp.ne.s32.totalorder %s30, %s33
      %p39 = scmp.eq.s32.totalorder %s20, 0
      %p40 = por %p38, %p39
      %p41 = scmp.ne.s32.totalorder %s30, %s33
      %p42 = scmp.eq.s32.totalorder %s25, 3
      %p43 = por %p41, %p42
      %p44 = scmp.ne.s32.totalorder %s33, %s34
      %p45 = scmp.eq.s32.totalorder %s25, 0
      %p46 = por %p44, %p45
      %p47 = scmp.ne.s32.totalorder %s33, %s34
      %p48 = scmp.eq.s32.totalorder %s26, 3
      %p49 = por %p47, %p48
      %p51 = scmp.ne.s32.totalorder %s34, %s50
      %p52 = scmp.eq.s32.totalorder %s26, 0
      %p53 = por %p51, %p52
      %s55 = sadd.s32 %s54, 1
      %p58 = scmp.eq.s32.totalorder %s20, 3
      %p59 = scmp.ne.s32.totalorder %s54, %s56
      %p60 = scmp.eq.s32.totalorder %s20, 0
      %p61 = por %p59, %p60
      %p62 = scmp.ne.s32.totalorder %s54, %s56
      %p63 = scmp.eq.s32.totalorder %s25, 3
      %p64 = por %p62, %p63
      %p65 = scmp.ne.s32.totalorder %s56, %s57
      %p66 = scmp.eq.s32.totalorder %s25, 0
      %p67 = por %p65, %p66
      %p68 = scmp.ne.s32.totalorder %s56, %s57
      %p69 = scmp.eq.s32.totalorder %s26, 3
      %p70 = por %p68, %p69
      %p72 = scmp.ne.s32.totalorder %s57, %s71
      %p73 = scmp.eq.s32.totalorder %s26, 0
      %p74 = por %p72, %p73
      %s76 = sadd.s32 %s75, 1
      %p79 = scmp.eq.s32.totalorder %s20, 3
      %p80 = scmp.ne.s32.totalorder %s75, %s77
      %p81 = scmp.eq.s32.totalorder %s20, 0
      %p82 = por %p80, %p81
      %p83 = scmp.ne.s32.totalorder %s75, %s77
      %p84 = scmp.eq.s32.totalorder %s25, 3
      %p85 = por %p83, %p84
      %p86 = scmp.ne.s32.totalorder %s77, %s78
      %p87 = scmp.eq.s32.totalorder %s25, 0
      %p88 = por %p86, %p87
      %p89 = scmp.ne.s32.totalorder %s77, %s78
      %p90 = scmp.eq.s32.totalorder %s26, 3
      %p91 = por %p89, %p90
      %p93 = scmp.ne.s32.totalorder %s78, %s92
      %p94 = scmp.eq.s32.totalorder %s26, 0
      %p95 = por %p93, %p94
      %s97 = sadd.s32 %s96, 1
      %p100 = scmp.eq.s32.totalorder %s20, 3
      %p101 = scmp.ne.s32.totalorder %s96, %s98
      %p102 = scmp.eq.s32.totalorder %s20, 0
      %p103 = por %p101, %p102
      %p104 = scmp.ne.s32.totalorder %s96, %s98
      %p105 = scmp.eq.s32.totalorder %s25, 3
      %p106 = por %p104, %p105
      %p107 = scmp.ne.s32.totalorder %s98, %s99
      %p108 = scmp.eq.s32.totalorder %s25, 0
      %p109 = por %p107, %p108
      %p110 = scmp.ne.s32.totalorder %s98, %s99
      %p111 = scmp.eq.s32.totalorder %s26, 3
      %p112 = por %p110, %p111
      %p114 = scmp.ne.s32.totalorder %s99, %s113
      %p115 = scmp.eq.s32.totalorder %s26, 0
      %p116 = por %p114, %p115
      %s118 = sadd.s32 %s117, 1
      %p121 = scmp.eq.s32.totalorder %s20, 3
      %p122 = scmp.ne.s32.totalorder %s117, %s119
      %p123 = scmp.eq.s32.totalorder %s20, 0
      %p124 = por %p122, %p123
      %p125 = scmp.ne.s32.totalorder %s117, %s119
      %p126 = scmp.eq.s32.totalorder %s25, 3
      %p127 = por %p125, %p126
      %p128 = scmp.ne.s32.totalorder %s119, %s120
      %p129 = scmp.eq.s32.totalorder %s25, 0
      %p130 = por %p128, %p129
      %p131 = scmp.ne.s32.totalorder %s119, %s120
      %p132 = scmp.eq.s32.totalorder %s26, 3
      %p133 = por %p131, %p132
      %p135 = scmp.ne.s32.totalorder %s120, %s134
      %p136 = scmp.eq.s32.totalorder %s26, 0
      %p137 = por %p135, %p136
      %s138 = ssub.s32 %s20, %s27
      %p139 = scmp.eq.s32.totalorder %s138, 0
      %s141 = sadd.s32 %s140, 1
      %s142 = scalar_select %p139, %s140, %s141
      %p145 = pneg %p139
      %p146 = scmp.eq.s32.totalorder %s20, 3
      %p147 = por %p145, %p146
      %p148 = scmp.ne.s32.totalorder %s140, %s143
      %p149 = scmp.eq.s32.totalorder %s20, 0
      %p150 = por %p148, %p149
      %p151 = scmp.ne.s32.totalorder %s140, %s143
      %p152 = scmp.eq.s32.totalorder %s25, 3
      %p153 = por %p151, %p152
      %p154 = scmp.ne.s32.totalorder %s143, %s144
      %p155 = scmp.eq.s32.totalorder %s25, 0
      %p156 = por %p154, %p155
      %p157 = scmp.ne.s32.totalorder %s143, %s144
      %p158 = scmp.eq.s32.totalorder %s26, 3
      %p159 = por %p157, %p158
      %p161 = scmp.ne.s32.totalorder %s144, %s160
      %p162 = scmp.eq.s32.totalorder %s26, 0
      %p163 = por %p161, %p162
      %p164 = scmp.le.s32.totalorder 1, %s20
      %p165 = scmp.lt.s32.totalorder %s20, 5
      %p166 = pnand %p164, %p165
      %p167 = pneg %p166
      // Predicated region
      $region9: #{tpu_custom_call.1} parent=5 // pred_check
        _
      $region10: #{tpu_custom_call.1} parent=5 // pred_check_branch
        %169 = sbr.rel (%p166) target = $region12
      $region11: #{tpu_custom_call.1} parent=5 // pred_region
        %s170 = ssub.s32 %s20, 1
        // Predicated region
        $region13: #{tpu_custom_call.1} parent=11 // pred_check
          %p171 = pneg %p67
        $region14: #{tpu_custom_call.1} parent=11 // pred_check_branch
          %173 = sbr.rel (%p171) target = $region16
        $region15: #{tpu_custom_call.1} parent=11 // pred_region
          %s175 = ssub.s32 2048, 2048
          %176 = vsyncadd [#allocation7], %s175
          %s177 = sshll.u32 [#allocation6], 4
          %s178 = int_to_ptr.vmem [resolvable:$true] %s177
          %183 = dma.hbm_to_vmem [thread:$0]  %s1, 2048, %s178, [#allocation7], 64, 64, 4
        $region16: #{tpu_custom_call.1} parent=11 // pred_fallthru
          _
        // Predicated region
        $region17: #{tpu_custom_call.1} parent=11 // pred_check
          %p184 = pneg %p88
        $region18: #{tpu_custom_call.1} parent=11 // pred_check_branch
          %186 = sbr.rel (%p184) target = $region20
        $region19: #{tpu_custom_call.1} parent=11 // pred_region
          _
        $region20: #{tpu_custom_call.1} parent=11 // pred_fallthru
          _
        // Predicated region
        $region21: #{tpu_custom_call.1} parent=11 // pred_check
          %p187 = pneg %p109
        $region22: #{tpu_custom_call.1} parent=11 // pred_check_branch
          %189 = sbr.rel (%p187) target = $region24
        $region23: #{tpu_custom_call.1} parent=11 // pred_region
          _
        $region24: #{tpu_custom_call.1} parent=11 // pred_fallthru
          _
        // Predicated region
        $region25: #{tpu_custom_call.1} parent=11 // pred_check
          %p190 = pneg %p130
        $region26: #{tpu_custom_call.1} parent=11 // pred_check_branch
          %192 = sbr.rel (%p190) target = $region28
        $region27: #{tpu_custom_call.1} parent=11 // pred_region
          _
        $region28: #{tpu_custom_call.1} parent=11 // pred_fallthru
          _
      $region12: #{tpu_custom_call.1} parent=5 // pred_fallthru
        _
      %p193 = scmp.lt.s32.totalorder %s20, 4
      // Predicated region
      $region29: #{tpu_custom_call.1} parent=5 // pred_check
        %p194 = pneg %p193
      $region30: #{tpu_custom_call.1} parent=5 // pred_check_branch
        %196 = sbr.rel (%p194) target = $region32
      $region31: #{tpu_custom_call.1} parent=5 // pred_region
        // Predicated region
        $region33: #{tpu_custom_call.1} parent=31 // pred_check
          %p197 = pneg %p40
        $region34: #{tpu_custom_call.1} parent=31 // pred_check_branch
          %199 = sbr.rel (%p197) target = $region36
        $region35: #{tpu_custom_call.1} parent=31 // pred_region
          %s200 = sand.u32 %s30, 1
          %s201 = scalar_lea.sflag [#allocation4], %s200
          %s202 = sand.u32 %s30, 1
          %s203 = smul.addr %s202, 256
          %s204 = scalar_lea.vmem [#allocation3], %s203
          %s205 = smul.u32 16, %s20
          %s206 = ssub.s32 50, %s205
          %p207 = scmp.lt.s32.totalorder %s206, 16
          %s208 = scalar_select %p207, %s206, 16
          %s209 = smul.u32 128, %s208
          %s210 = smul.u32 %s209, 2
          %s212 = ssub.s32 4096, %s210
          %213 = vsyncadd %s201, %s212
          %p214 = scmp.ne.s32.totalorder 0, %s210
          %s215 = smul.addr %s205, 2
          %s216 = smul.addr %s215, 128
          %s217 = scalar_lea.hbm %s0, %s216
          %s218 = smul.u32 16, %s208
          %s219 = sshll.u32 %s204, 4
          %s220 = int_to_ptr.vmem [resolvable:$true] %s219
          %s221 = sshll.u32 %s218, 4
          %225 = dma.hbm_to_vmem [thread:$0]  (%p214), %s217, %s221, %s220, %s201, 256, 256, 16
        $region36: #{tpu_custom_call.1} parent=31 // pred_fallthru
          _
      $region32: #{tpu_custom_call.1} parent=5 // pred_fallthru
        _
      %p226 = scmp.le.s32.totalorder 1, %s20
      %p227 = scmp.lt.s32.totalorder %s20, 5
      %p228 = pnand %p226, %p227
      %p229 = pneg %p228
      // Predicated region
      $region37: #{tpu_custom_call.1} parent=5 // pred_check
        _
      $region38: #{tpu_custom_call.1} parent=5 // pred_check_branch
        %231 = sbr.rel (%p228) target = $region40
      $region39: #{tpu_custom_call.1} parent=5 // pred_region
        %s232 = ssub.s32 %s20, 1
        %s233 = sand.u32 %s33, 1
        %s234 = scalar_lea.sflag [#allocation4], %s233
        %s235 = sand.u32 %s33, 1
        %s236 = smul.addr %s235, 256
        %s237 = scalar_lea.vmem [#allocation3], %s236
        // Predicated region
        $region41: #{tpu_custom_call.1} parent=39 // pred_check
          %p238 = pneg %p46
        $region42: #{tpu_custom_call.1} parent=39 // pred_check_branch
          %240 = sbr.rel (%p238) target = $region44
        $region43: #{tpu_custom_call.1} parent=39 // pred_region
          %241 = dma.done %s234, 4096
        $region44: #{tpu_custom_call.1} parent=39 // pred_fallthru
          _
        // Predicated region
        $region45: #{tpu_custom_call.1} parent=39 // pred_check
          %p242 = pneg %p67
        $region46: #{tpu_custom_call.1} parent=39 // pred_check_branch
          %244 = sbr.rel (%p242) target = $region48
        $region47: #{tpu_custom_call.1} parent=39 // pred_region
          %245 = dma.done [#allocation7], 2048
        $region48: #{tpu_custom_call.1} parent=39 // pred_fallthru
          _
        %s246 = sand.u32 %s33, 1
        %s247 = scalar_lea.sflag [#allocation4], %s246
        %s248 = sand.u32 %s33, 1
        %s249 = smul.addr %s248, 256
        %s250 = scalar_lea.vmem [#allocation3], %s249
        %p251 = pneg %p46
        %p252 = pneg %p43
        %p253 = pneg %p67
        %p254 = pneg %p64
        %p255 = pneg %p88
        %p256 = pneg %p85
        %p257 = pneg %p109
        %p258 = pneg %p106
        %p259 = pneg %p130
        %p260 = pneg %p127
        %p261 = pneg %p156
        %p262 = pneg %p153
        %s263 = sand.u32 %s143, 1
        %s264 = scalar_lea.sflag [#allocation5], %s263
        %s265 = sand.u32 %s143, 1
        %s266 = scalar_lea.vmem [#allocation8], %s265
        %s267 = smul.u32 16, %s25
        %s268 = ssub.s32 50, %s267
        %p269 = scmp.lt.s32.totalorder %s268, 16
        %s270 = scalar_select %p269, %s268, 16
        %s271 = smul.u32 128, %s270
        %s272 = smul.u32 %s271, 2
        %v274 = vld [vmem:[%s237] sm:$0xff]
        %v275 = vld [vmem:[%s237 + $0x8] sm:$0xff]
        %v276 = vld [vmem:[%s237 + $0x10] sm:$0xff]
        %v277 = vld [vmem:[%s237 + $0x18] sm:$0xff]
        %v278 = vld [vmem:[%s237 + $0x20] sm:$0xff]
        %v279 = vld [vmem:[%s237 + $0x28] sm:$0xff]
        %v280 = vld [vmem:[%s237 + $0x30] sm:$0xff]
        %v281 = vld [vmem:[%s237 + $0x38] sm:$0xff]
        %v282 = vld [vmem:[%s237 + $0x40] sm:$0xff]
        %v283 = vld [vmem:[%s237 + $0x48] sm:$0xff]
        %v284 = vld [vmem:[%s237 + $0x50] sm:$0xff]
        %v285 = vld [vmem:[%s237 + $0x58] sm:$0xff]
        %v286 = vld [vmem:[%s237 + $0x60] sm:$0xff]
        %v287 = vld [vmem:[%s237 + $0x68] sm:$0xff]
        %v288 = vld [vmem:[%s237 + $0x70] sm:$0xff]
        %v289 = vld [vmem:[%s237 + $0x78] sm:$0xff]
        %v290 = vld [vmem:[%s237 + $0x80] sm:$0xff]
        %v291 = vld [vmem:[%s237 + $0x88] sm:$0xff]
        %v292 = vld [vmem:[%s237 + $0x90] sm:$0xff]
        %v293 = vld [vmem:[%s237 + $0x98] sm:$0xff]
        %v294 = vld [vmem:[%s237 + $0xa0] sm:$0xff]
        %v295 = vld [vmem:[%s237 + $0xa8] sm:$0xff]
        %v296 = vld [vmem:[%s237 + $0xb0] sm:$0xff]
        %v297 = vld [vmem:[%s237 + $0xb8] sm:$0xff]
        %v298 = vld [vmem:[%s237 + $0xc0] sm:$0xff]
        %v299 = vld [vmem:[%s237 + $0xc8] sm:$0xff]
        %v300 = vld [vmem:[%s237 + $0xd0] sm:$0xff]
        %v301 = vld [vmem:[%s237 + $0xd8] sm:$0xff]
        %v302 = vld [vmem:[%s237 + $0xe0] sm:$0xff]
        %v303 = vld [vmem:[%s237 + $0xe8] sm:$0xff]
        %v304 = vld [vmem:[%s237 + $0xf0] sm:$0xff]
        %v305 = vld [vmem:[%s237 + $0xf8] sm:$0xff]
        %v306 = vpack.c.bf16 %v276, %v274
        %v307 = vpack.c.bf16 %v277, %v275
        %v308 = vpack.c.bf16 %v280, %v278
        %v309 = vpack.c.bf16 %v281, %v279
        %v310 = vpack.c.bf16 %v284, %v282
        %v311 = vpack.c.bf16 %v285, %v283
        %v312 = vpack.c.bf16 %v288, %v286
        %v313 = vpack.c.bf16 %v289, %v287
        %v314 = vpack.c.bf16 %v292, %v290
        %v315 = vpack.c.bf16 %v293, %v291
        %v316 = vpack.c.bf16 %v296, %v294
        %v317 = vpack.c.bf16 %v297, %v295
        %v318 = vpack.c.bf16 %v300, %v298
        %v319 = vpack.c.bf16 %v301, %v299
        %v320 = vpack.c.bf16 %v304, %v302
        %v321 = vpack.c.bf16 %v305, %v303
        %v322 = vld [vmem:[#allocation6] sm:$0xf]
        %v323 = vld [vmem:[#allocation6 + $0x4] sm:$0xf]
        %v324 = vld [vmem:[#allocation6 + $0x8] sm:$0xf]
        %v325 = vld [vmem:[#allocation6 + $0xc] sm:$0xf]
        %v326 = vld [vmem:[#allocation6 + $0x10] sm:$0xf]
        %v327 = vld [vmem:[#allocation6 + $0x14] sm:$0xf]
        %v328 = vld [vmem:[#allocation6 + $0x18] sm:$0xf]
        %v329 = vld [vmem:[#allocation6 + $0x1c] sm:$0xf]
        %v330 = vld [vmem:[#allocation6 + $0x20] sm:$0xf]
        %v331 = vld [vmem:[#allocation6 + $0x24] sm:$0xf]
        %v332 = vld [vmem:[#allocation6 + $0x28] sm:$0xf]
        %v333 = vld [vmem:[#allocation6 + $0x2c] sm:$0xf]
        %v334 = vld [vmem:[#allocation6 + $0x30] sm:$0xf]
        %v335 = vld [vmem:[#allocation6 + $0x34] sm:$0xf]
        %v336 = vld [vmem:[#allocation6 + $0x38] sm:$0xf]
        %v337 = vld [vmem:[#allocation6 + $0x3c] sm:$0xf]
        %v338 = vld [vmem:[#allocation6 + $0x40] sm:$0xf]
        %v339 = vld [vmem:[#allocation6 + $0x44] sm:$0xf]
        %v340 = vld [vmem:[#allocation6 + $0x48] sm:$0xf]
        %v341 = vld [vmem:[#allocation6 + $0x4c] sm:$0xf]
        %v342 = vld [vmem:[#allocation6 + $0x50] sm:$0xf]
        %v343 = vld [vmem:[#allocation6 + $0x54] sm:$0xf]
        %v344 = vld [vmem:[#allocation6 + $0x58] sm:$0xf]
        %v345 = vld [vmem:[#allocation6 + $0x5c] sm:$0xf]
        %v346 = vld [vmem:[#allocation6 + $0x60] sm:$0xf]
        %v347 = vld [vmem:[#allocation6 + $0x64] sm:$0xf]
        %v348 = vld [vmem:[#allocation6 + $0x68] sm:$0xf]
        %v349 = vld [vmem:[#allocation6 + $0x6c] sm:$0xf]
        %v350 = vld [vmem:[#allocation6 + $0x70] sm:$0xf]
        %v351 = vld [vmem:[#allocation6 + $0x74] sm:$0xf]
        %v352 = vld [vmem:[#allocation6 + $0x78] sm:$0xf]
        %v353 = vld [vmem:[#allocation6 + $0x7c] sm:$0xf]
        %v354 = vld [vmem:[%s2] sm:$0x1]
        %v356 = vlaneseq
        %v357 = vshrl.u32 %v356, 7
        %v358 = vsub.s32 0, %v357
        %v359 = vrot.slane %v354, %v358
        %v393 = vunpack.c.l.b16 %v322
        %v394 = vunpack.c.l.b16 %v323
        %v395 = vunpack.c.l.b16 %v324
        %v396 = vunpack.c.l.b16 %v325
        %v397 = vunpack.c.l.b16 %v326
        %v398 = vunpack.c.l.b16 %v327
        %v399 = vunpack.c.l.b16 %v328
        %v400 = vunpack.c.l.b16 %v329
        %v401 = vunpack.c.l.b16 %v330
        %v402 = vunpack.c.l.b16 %v331
        %v403 = vunpack.c.l.b16 %v332
        %v404 = vunpack.c.l.b16 %v333
        %v405 = vunpack.c.l.b16 %v334
        %v406 = vunpack.c.l.b16 %v335
        %v407 = vunpack.c.l.b16 %v336
        %v408 = vunpack.c.l.b16 %v337
        %v409 = vunpack.c.l.b16 %v338
        %v410 = vunpack.c.l.b16 %v339
        %v411 = vunpack.c.l.b16 %v340
        %v412 = vunpack.c.l.b16 %v341
        %v413 = vunpack.c.l.b16 %v342
        %v414 = vunpack.c.l.b16 %v343
        %v415 = vunpack.c.l.b16 %v344
        %v416 = vunpack.c.l.b16 %v345
        %v417 = vunpack.c.l.b16 %v346
        %v418 = vunpack.c.l.b16 %v347
        %v419 = vunpack.c.l.b16 %v348
        %v420 = vunpack.c.l.b16 %v349
        %v421 = vunpack.c.l.b16 %v350
        %v422 = vunpack.c.l.b16 %v351
        %v423 = vunpack.c.l.b16 %v352
        %v424 = vunpack.c.l.b16 %v353
        %v425 = vpack.c.b16 %v394, %v393
        %v426 = vpack.c.b16 %v396, %v395
        %v427 = vpack.c.b16 %v398, %v397
        %v428 = vpack.c.b16 %v400, %v399
        %v429 = vpack.c.b16 %v402, %v401
        %v430 = vpack.c.b16 %v404, %v403
        %v431 = vpack.c.b16 %v406, %v405
        %v432 = vpack.c.b16 %v408, %v407
        %v433 = vpack.c.b16 %v410, %v409
        %v434 = vpack.c.b16 %v412, %v411
        %v435 = vpack.c.b16 %v414, %v413
        %v436 = vpack.c.b16 %v416, %v415
        %v437 = vpack.c.b16 %v418, %v417
        %v438 = vpack.c.b16 %v420, %v419
        %v439 = vpack.c.b16 %v422, %v421
        %v440 = vpack.c.b16 %v424, %v423
        %457 = vmatprep.subr.bf16.mxu0 0
        %458 = vmatpush1.bf16.msra.mxu0 %v425
        %459 = vmatprep.subr.bf16.mxu0 0
        %460 = vmatpush1.bf16.msra.mxu0 %v426
        %461 = vmatprep.subr.bf16.mxu0 0
        %462 = vmatpush1.bf16.msra.mxu0 %v427
        %463 = vmatprep.subr.bf16.mxu0 0
        %464 = vmatpush1.bf16.msra.mxu0 %v428
        %465 = vmatprep.subr.bf16.mxu0 0
        %466 = vmatpush1.bf16.msra.mxu0 %v429
        %467 = vmatprep.subr.bf16.mxu0 0
        %468 = vmatpush1.bf16.msra.mxu0 %v430
        %469 = vmatprep.subr.bf16.mxu0 0
        %470 = vmatpush1.bf16.msra.mxu0 %v431
        %471 = vmatprep.subr.bf16.mxu0 0
        %472 = vmatpush1.bf16.msra.mxu0 %v432
        %473 = vmatprep.subr.bf16.mxu0 0
        %474 = vmatpush1.bf16.msra.mxu0 %v433
        %475 = vmatprep.subr.bf16.mxu0 0
        %476 = vmatpush1.bf16.msra.mxu0 %v434
        %477 = vmatprep.subr.bf16.mxu0 0
        %478 = vmatpush1.bf16.msra.mxu0 %v435
        %479 = vmatprep.subr.bf16.mxu0 0
        %480 = vmatpush1.bf16.msra.mxu0 %v436
        %481 = vmatprep.subr.bf16.mxu0 0
        %482 = vmatpush1.bf16.msra.mxu0 %v437
        %483 = vmatprep.subr.bf16.mxu0 0
        %484 = vmatpush1.bf16.msra.mxu0 %v438
        %485 = vmatprep.subr.bf16.mxu0 0
        %486 = vmatpush1.bf16.msra.mxu0 %v439
        %487 = vmatprep.subr.bf16.mxu0 0
        %488 = vmatpush1.bf16.msra.mxu0 %v440
        %489 = vmatprep.mubr.bf16.mxu0 %v307
        %490 = vmatmul.mubr.bf16.gmra.mrb[0].mxu0 %v306
        %v491 = vpop.f32.mrb[0].mxu0
        %v492 = vadd.f32 %v359, %v491
        %v493 = vpop.f32.mrb[0].mxu0
        %v494 = vpop.f32.mrb[0].mxu0
        %v495 = vadd.f32 %v359, %v494
        %v496 = vpop.f32.mrb[0].mxu0
        %497 = vmatprep.mubr.bf16.mxu0 %v309
        %498 = vmatmul.mubr.bf16.gmra.mrb[0].mxu0 %v308
        %v499 = vpop.f32.mrb[0].mxu0
        %v500 = vadd.f32 %v359, %v499
        %v501 = vpop.f32.mrb[0].mxu0
        %v502 = vpop.f32.mrb[0].mxu0
        %v503 = vadd.f32 %v359, %v502
        %v504 = vpop.f32.mrb[0].mxu0
        %505 = vmatprep.mubr.bf16.mxu0 %v311
        %506 = vmatmul.mubr.bf16.gmra.mrb[0].mxu0 %v310
        %v507 = vpop.f32.mrb[0].mxu0
        %v508 = vadd.f32 %v359, %v507
        %v509 = vpop.f32.mrb[0].mxu0
        %v510 = vpop.f32.mrb[0].mxu0
        %v511 = vadd.f32 %v359, %v510
        %v512 = vpop.f32.mrb[0].mxu0
        %513 = vmatprep.mubr.bf16.mxu0 %v313
        %514 = vmatmul.mubr.bf16.gmra.mrb[0].mxu0 %v312
        %v515 = vpop.f32.mrb[0].mxu0
        %v516 = vadd.f32 %v359, %v515
        %v517 = vpop.f32.mrb[0].mxu0
        %v518 = vpop.f32.mrb[0].mxu0
        %v519 = vadd.f32 %v359, %v518
        %v520 = vpop.f32.mrb[0].mxu0
        %521 = vmatprep.mubr.bf16.mxu0 %v315
        %522 = vmatmul.mubr.bf16.gmra.mrb[0].mxu0 %v314
        %v523 = vpop.f32.mrb[0].mxu0
        %v524 = vadd.f32 %v359, %v523
        %v525 = vpop.f32.mrb[0].mxu0
        %v526 = vpop.f32.mrb[0].mxu0
        %v527 = vadd.f32 %v359, %v526
        %v528 = vpop.f32.mrb[0].mxu0
        %529 = vmatprep.mubr.bf16.mxu0 %v317
        %530 = vmatmul.mubr.bf16.gmra.mrb[0].mxu0 %v316
        %v531 = vpop.f32.mrb[0].mxu0
        %v532 = vadd.f32 %v359, %v531
        %v533 = vpop.f32.mrb[0].mxu0
        %v534 = vpop.f32.mrb[0].mxu0
        %v535 = vadd.f32 %v359, %v534
        %v536 = vpop.f32.mrb[0].mxu0
        %537 = vmatprep.mubr.bf16.mxu0 %v319
        %538 = vmatmul.mubr.bf16.gmra.mrb[0].mxu0 %v318
        %v539 = vpop.f32.mrb[0].mxu0
        %v540 = vadd.f32 %v359, %v539
        %v541 = vpop.f32.mrb[0].mxu0
        %v542 = vpop.f32.mrb[0].mxu0
        %v543 = vadd.f32 %v359, %v542
        %v544 = vpop.f32.mrb[0].mxu0
        %545 = vmatprep.mubr.bf16.mxu0 %v321
        %546 = vmatmul.mubr.bf16.gmra.mrb[0].mxu0 %v320
        %v547 = vpop.f32.mrb[0].mxu0
        %v548 = vadd.f32 %v359, %v547
        %v549 = vpop.f32.mrb[0].mxu0
        %v550 = vpop.f32.mrb[0].mxu0
        %v551 = vadd.f32 %v359, %v550
        %v552 = vpop.f32.mrb[0].mxu0
        %553 = vdwg.mxu0
        %v554 = vmax.f32 %v492, 0.0
        %v555 = vmax.f32 %v495, 0.0
        %v556 = vmax.f32 %v500, 0.0
        %v557 = vmax.f32 %v503, 0.0
        %v558 = vmax.f32 %v508, 0.0
        %v559 = vmax.f32 %v511, 0.0
        %v560 = vmax.f32 %v516, 0.0
        %v561 = vmax.f32 %v519, 0.0
        %v562 = vmax.f32 %v524, 0.0
        %v563 = vmax.f32 %v527, 0.0
        %v564 = vmax.f32 %v532, 0.0
        %v565 = vmax.f32 %v535, 0.0
        %v566 = vmax.f32 %v540, 0.0
        %v567 = vmax.f32 %v543, 0.0
        %v568 = vmax.f32 %v548, 0.0
        %v569 = vmax.f32 %v551, 0.0
        %v570 = vld [vmem:[%s3] sm:$0x1]
        %v571 = vpack.c.bf16 %v555, %v554
        %v572 = vpack.c.bf16 %v557, %v556
        %v573 = vpack.c.bf16 %v559, %v558
        %v574 = vpack.c.bf16 %v561, %v560
        %v575 = vpack.c.bf16 %v563, %v562
        %v576 = vpack.c.bf16 %v565, %v564
        %v577 = vpack.c.bf16 %v567, %v566
        %v578 = vpack.c.bf16 %v569, %v568
        %v579 = vld [vmem:[#allocation2] sm:$0x1]
        %581 = vset.pattern.permute.xlu0 0
        %582 = vperm.xlu0 %581, %v579
        %v583 = vpop.permute.xlu0 %582
        %v585 = vlaneseq
        %v586 = vshrl.u32 %v585, 7
        %v587 = vsub.s32 0, %v586
        %v588 = vrot.slane %v583, %v587
        %589 = vmatprep.subr.bf16.mxu0 0
        %590 = vmatpush1.bf16.xpose.msra.mxu0 %v571
        %591 = vmatprep.subr.bf16.mxu0 0
        %592 = vmatpush1.bf16.xpose.msra.mxu0 %v572
        %593 = vmatprep.subr.bf16.mxu0 0
        %594 = vmatpush1.bf16.xpose.msra.mxu0 %v573
        %595 = vmatprep.subr.bf16.mxu0 0
        %596 = vmatpush1.bf16.xpose.msra.mxu0 %v574
        %597 = vmatprep.subr.bf16.mxu0 0
        %598 = vmatpush1.bf16.xpose.msra.mxu0 %v575
        %599 = vmatprep.subr.bf16.mxu0 0
        %600 = vmatpush1.bf16.xpose.msra.mxu0 %v576
        %601 = vmatprep.subr.bf16.mxu0 0
        %602 = vmatpush1.bf16.xpose.msra.mxu0 %v577
        %603 = vmatprep.subr.bf16.mxu0 0
        %604 = vmatpush1.bf16.xpose.msra.mxu0 %v578
        %605 = vmatprep.subr.bf16.mxu0 0
        %606 = vmatpush1.bf16.xpose.msra.mxu0 0
        %607 = vmatprep.subr.bf16.mxu0 0
        %608 = vmatpush1.bf16.xpose.msra.mxu0 0
        %609 = vmatprep.subr.bf16.mxu0 0
        %610 = vmatpush1.bf16.xpose.msra.mxu0 0
        %611 = vmatprep.subr.bf16.mxu0 0
        %612 = vmatpush1.bf16.xpose.msra.mxu0 0
        %613 = vmatprep.subr.bf16.mxu0 0
        %614 = vmatpush1.bf16.xpose.msra.mxu0 0
        %615 = vmatprep.subr.bf16.mxu0 0
        %616 = vmatpush1.bf16.xpose.msra.mxu0 0
        %617 = vmatprep.subr.bf16.mxu0 0
        %618 = vmatpush1.bf16.xpose.msra.mxu0 0
        %619 = vmatprep.subr.bf16.mxu0 0
        %620 = vmatpush1.bf16.xpose.msra.mxu0 0
        %621 = vmatprep.mubr.bf16.mxu0 0
        %622 = vmatmul.mubr.bf16.gmra.mrb[0].mxu0 %v570
        %v623 = vpop.f32.mrb[0].mxu0
        %v624 = vadd.f32 %v588, %v623
        %v625 = vpop.f32.mrb[0].mxu0
        %v626 = vpop.f32.mrb[0].mxu0
        %v627 = vpop.f32.mrb[0].mxu0
        %628 = vdwg.mxu0
        %629 = vst [vmem:[%s266] sm:$0x1] %v624
        %s630 = sand.u32 %s143, 1
        %s631 = scalar_lea.sflag [#allocation5], %s630
        %s632 = sand.u32 %s143, 1
        %s633 = scalar_lea.vmem [#allocation8], %s632
        // Predicated region
        $region49: #{tpu_custom_call.1} parent=39 // pred_check
          %p634 = pneg %p153
        $region50: #{tpu_custom_call.1} parent=39 // pred_check_branch
          %636 = sbr.rel (%p634) target = $region52
        $region51: #{tpu_custom_call.1} parent=39 // pred_region
          %s638 = ssub.s32 16, 16
          %639 = vsyncadd %s631, %s638
          %s640 = smul.addr %s25, 16
          %s641 = scalar_lea.hbm %s5, %s640
          %s643 = sshll.u32 %s633, 4
          %s644 = int_to_ptr.vmem [resolvable:$true] %s643
          %646 = dma.vmem_to_hbm [thread:$0]  %s644, 16, %s641, %s631
        $region52: #{tpu_custom_call.1} parent=39 // pred_fallthru
          _
      $region40: #{tpu_custom_call.1} parent=5 // pred_fallthru
        _
      %p647 = scmp.le.s32.totalorder 2, %s20
      // Predicated region
      $region53: #{tpu_custom_call.1} parent=5 // pred_check
        %p648 = pneg %p647
      $region54: #{tpu_custom_call.1} parent=5 // pred_check_branch
        %650 = sbr.rel (%p648) target = $region56
      $region55: #{tpu_custom_call.1} parent=5 // pred_region
        %s651 = ssub.s32 %s20, 2
        // Predicated region
        $region57: #{tpu_custom_call.1} parent=55 // pred_check
          %p652 = pneg %p159
        $region58: #{tpu_custom_call.1} parent=55 // pred_check_branch
          %654 = sbr.rel (%p652) target = $region60
        $region59: #{tpu_custom_call.1} parent=55 // pred_region
          %s655 = sand.u32 %s144, 1
          %s656 = scalar_lea.sflag [#allocation5], %s655
          %s657 = sand.u32 %s144, 1
          %s658 = scalar_lea.vmem [#allocation8], %s657
          %659 = dma.done %s656, 16
        $region60: #{tpu_custom_call.1} parent=55 // pred_fallthru
          _
      $region56: #{tpu_custom_call.1} parent=5 // pred_fallthru
        _
    $region6: #{tpu_custom_call.1} parent=1 // loop_footer
      %s24 = sadd.s32 1, %s20
    $region7: #{tpu_custom_call.1} parent=1 // loop_footer_branch
      %19 = sbr.rel target = $region3
    $region8: #{tpu_custom_call.1} parent=1 // loop_exit
      _
    %660 = vsyncpa [#allocation4], 1
    %s661 = scalar_lea.sflag [#allocation4], 1
    %662 = vsyncpa %s661, 1
    %663 = vsyncpa [#allocation7], 1
    %664 = vsyncpa [#allocation5], 1
    %s665 = scalar_lea.sflag [#allocation5], 1
    %666 = vsyncpa %s665, 1

</llo_original>
